<compile_context>
chip_gen: v5e
topology: v5e:2x2
jax: 0.10.0
libtpu: 0.0.40
codegen_flags: <defaults>
</compile_context>

<pallas_src>
import functools
import math

import jax
import jax.numpy as jnp
from jax.experimental import pallas as pl


def _er_w2v_kernel(emb_ref, wt_ref, b_ref, out_ref):
    # emb_ref : (Bp, E)  f32   gathered embedding rows (batch-padded)
    # wt_ref  : (E, Vp)  f32   decoder weight, transposed + lane-padded
    # b_ref   : (1, Vp)  f32   decoder bias, lane-padded
    # out_ref : (Bp, Vp) f32   logits
    E = wt_ref.shape[0]
    emb = emb_ref[...]                                     # (Bp, E)
    acc = jnp.broadcast_to(b_ref[...], out_ref.shape)      # bias broadcast once
    if E <= 16:
        # Tiny contraction dim: E broadcast-FMAs on full (Bp, Vp) vregs (VPU),
        # covering the whole batch per FMA; keeps the MXU slot free.
        for e in range(E):
            acc = acc + emb[:, e:e + 1] * wt_ref[e:e + 1, :]
    else:
        # Large embedding size: MXU with batched M (Bp >= 8; tile to 128/256
        # rows before relying on this path at scale).
        acc = acc + jnp.dot(emb, wt_ref[...], preferred_element_type=jnp.float32)
    out_ref[...] = acc


@functools.partial(jax.jit, static_argnames=("vocab",))
def _forward_one_arm(indices, emb_table, wt_pad, b_pad, *, vocab):
    """indices: (B,) int; emb_table: (V, E) f32; wt_pad: (E, Vp); b_pad: (1, Vp)."""
    B = indices.shape[0]
    V = vocab
    E = emb_table.shape[1]
    Vp = wt_pad.shape[1]
    Bp = ((B + 7) // 8) * 8                     # sublane-pad the batch

    # Clamp to valid range (PyTorch Embedding would raise on OOB indices).
    idx = jnp.clip(indices.astype(jnp.int32), 0, V - 1)
    emb = emb_table[idx]                        # tiny XLA gather, fused under jit
    if Bp != B:
        emb = jnp.pad(emb, ((0, Bp - B), (0, 0)))

    out_pad = pl.pallas_call(
        _er_w2v_kernel,
        out_shape=jax.ShapeDtypeStruct((Bp, Vp), jnp.float32),
        grid=(1,),                              # single step: whole problem at once
        in_specs=[
            pl.BlockSpec((Bp, E), lambda i: (0, 0)),
            pl.BlockSpec((E, Vp), lambda i: (0, 0)),
            pl.BlockSpec((1, Vp), lambda i: (0, 0)),
        ],
        out_specs=pl.BlockSpec((Bp, Vp), lambda i: (0, 0)),
    )(emb, wt_pad, b_pad)

    return out_pad[:B, :V]                      # drop batch / vocab padding


class EmitterReceiverWord2VecPallas:
    """Pallas port of EmitterReceiver_Word2Vec (deterministic init)."""

    def __init__(self, vocab_size=(93,), embedding_size=2, n_arm=1, seed=0):
        self.vocab_size = list(vocab_size)
        self.embedding_size = embedding_size
        self.n_arm = n_arm

        key = jax.random.PRNGKey(seed)
        self.emb_tables = []
        self.lin_ws = []
        self.lin_bs = []
        self.wt_pads = []                       # (E, Vp) built once, not per call
        self.b_pads = []                        # (1, Vp) built once, not per call
        for arm in range(n_arm):
            V = self.vocab_size[arm]
            E = embedding_size
            key, k_emb, k_w, k_b = jax.random.split(key, 4)
            # nn.Embedding default init: N(0, 1)
            emb = jax.random.normal(k_emb, (V, E), dtype=jnp.float32)
            # nn.Linear default init: U(-1/sqrt(in), 1/sqrt(in))
            bound = 1.0 / math.sqrt(E)
            w = jax.random.uniform(k_w, (V, E), dtype=jnp.float32,
                                   minval=-bound, maxval=bound)
            b = jax.random.uniform(k_b, (V,), dtype=jnp.float32,
                                   minval=-bound, maxval=bound)
            self.emb_tables.append(emb)
            self.lin_ws.append(w)
            self.lin_bs.append(b)

            # Lane-dense vocab padding + transpose, hoisted out of the call path.
            Vp = ((V + 127) // 128) * 128
            wt_pad = jnp.zeros((E, Vp), jnp.float32).at[:, :V].set(w.T)
            b_pad = jnp.zeros((1, Vp), jnp.float32).at[:, :V].set(b[None, :])
            self.wt_pads.append(wt_pad)
            self.b_pads.append(b_pad)

    def __call__(self, context_word):
        # context_word: list (len n_arm) of (B,) int32 index arrays.
        predictions = []
        for arm in range(self.n_arm):
            # which_arm = arm (module decodes its own arm's embedding)
            predictions.append(
                _forward_one_arm(
                    context_word[arm],
                    self.emb_tables[arm],
                    self.wt_pads[arm],
                    self.b_pads[arm],
                    vocab=self.vocab_size[arm],
                )
            )
        return predictions


if __name__ == "__main__":
    vocab_size = [93]
    embedding_size = 2
    n_arm = 1
    batch = 8

    model = EmitterReceiverWord2VecPallas(
        vocab_size=vocab_size, embedding_size=embedding_size, n_arm=n_arm, seed=0)

    key = jax.random.PRNGKey(0)
    context_word = []
    for arm in range(n_arm):
        key, sub = jax.random.split(key)
        idx = jax.random.randint(sub, (batch,), 0, vocab_size[arm], dtype=jnp.int32)
        context_word.append(idx)

    preds = model(context_word)
    preds = [jax.block_until_ready(p) for p in preds]

    # pure-JAX reference check
    for arm in range(n_arm):
        emb = model.emb_tables[arm][context_word[arm]]            # (B, E)
        ref = emb @ model.lin_ws[arm].T + model.lin_bs[arm]       # (B, V)
        assert preds[arm].shape == (batch, vocab_size[arm])
        assert jnp.allclose(preds[arm], ref, atol=1e-5, rtol=1e-5)

    print("KERNEL_OK")
</pallas_src>

<mosaic_0001>
module attributes {stable_mosaic.version = 11 : i64} {
  func.func @_er_w2v_kernel(%arg0: i32, %arg1: memref<8x2xf32, #tpu.memory_space<vmem>>, %arg2: memref<2x128xf32, #tpu.memory_space<vmem>>, %arg3: memref<1x128xf32, #tpu.memory_space<vmem>>, %arg4: memref<8x128xf32, #tpu.memory_space<vmem>>) attributes {dimension_semantics = [#tpu.dimension_semantics<arbitrary>], iteration_bounds = array<i64: 1>, scalar_prefetch = 0 : i64, scratch_operands = 0 : i64, tpu.core_type = #tpu.core_type<tc>, window_params = [{pipeline_mode = #tpu.pipeline_mode<synchronous>, transform_indices = @transform_0, window_bounds = array<i64: 8, 2>}, {pipeline_mode = #tpu.pipeline_mode<synchronous>, transform_indices = @transform_1, window_bounds = array<i64: 2, 128>}, {pipeline_mode = #tpu.pipeline_mode<synchronous>, transform_indices = @transform_2, window_bounds = array<i64: 1, 128>}, {pipeline_mode = #tpu.pipeline_mode<synchronous>, transform_indices = @transform_3, window_bounds = array<i64: 8, 128>}]} {
    %c0 = arith.constant 0 : index
    %c0_0 = arith.constant 0 : index
    %0 = vector.load %arg1[%c0, %c0_0] : memref<8x2xf32, #tpu.memory_space<vmem>>, vector<8x2xf32>
    %c0_1 = arith.constant 0 : index
    %c0_2 = arith.constant 0 : index
    %1 = vector.load %arg3[%c0_1, %c0_2] : memref<1x128xf32, #tpu.memory_space<vmem>>, vector<1x128xf32>
    %2 = vector.shape_cast %1 : vector<1x128xf32> to vector<1x128xf32>
    %3 = vector.broadcast %2 : vector<1x128xf32> to vector<8x128xf32>
    %4 = vector.extract_strided_slice %0 {offsets = [0, 0], sizes = [8, 1], strides = [1, 1]} : vector<8x2xf32> to vector<8x1xf32>
    %c0_3 = arith.constant 0 : index
    %c0_4 = arith.constant 0 : index
    %5 = vector.load %arg2[%c0_3, %c0_4] : memref<2x128xf32, #tpu.memory_space<vmem>>, vector<1x128xf32>
    %6 = vector.broadcast %4 : vector<8x1xf32> to vector<8x128xf32>
    %7 = vector.broadcast %5 : vector<1x128xf32> to vector<8x128xf32>
    %8 = arith.mulf %6, %7 : vector<8x128xf32>
    %9 = arith.addf %3, %8 : vector<8x128xf32>
    %10 = vector.extract_strided_slice %0 {offsets = [0, 1], sizes = [8, 1], strides = [1, 1]} : vector<8x2xf32> to vector<8x1xf32>
    %c1 = arith.constant 1 : index
    %c0_5 = arith.constant 0 : index
    %11 = vector.load %arg2[%c1, %c0_5] : memref<2x128xf32, #tpu.memory_space<vmem>>, vector<1x128xf32>
    %12 = vector.broadcast %10 : vector<8x1xf32> to vector<8x128xf32>
    %13 = vector.broadcast %11 : vector<1x128xf32> to vector<8x128xf32>
    %14 = arith.mulf %12, %13 : vector<8x128xf32>
    %15 = arith.addf %9, %14 : vector<8x128xf32>
    %c0_6 = arith.constant 0 : index
    %c0_7 = arith.constant 0 : index
    %16 = vector.load %arg4[%c0_6, %c0_7] : memref<8x128xf32, #tpu.memory_space<vmem>>, vector<8x128xf32>
    tpu.vector_store %arg4[%c0_6, %c0_7], %15 {strides = array<i32>} : memref<8x128xf32, #tpu.memory_space<vmem>>, vector<8x128xf32>,
    return
  }
  func.func @transform_0(%arg0: i32) -> (i32, i32) {
    %c0_i32 = arith.constant 0 : i32
    %c0_i32_0 = arith.constant 0 : i32
    %c0_i32_1 = arith.constant 0 : i32
    return %c0_i32, %c0_i32_0 : i32, i32
  }
  func.func @transform_1(%arg0: i32) -> (i32, i32) {
    %c0_i32 = arith.constant 0 : i32
    %c0_i32_0 = arith.constant 0 : i32
    %c0_i32_1 = arith.constant 0 : i32
    return %c0_i32, %c0_i32_0 : i32, i32
  }
  func.func @transform_2(%arg0: i32) -> (i32, i32) {
    %c0_i32 = arith.constant 0 : i32
    %c0_i32_0 = arith.constant 0 : i32
    %c0_i32_1 = arith.constant 0 : i32
    return %c0_i32, %c0_i32_0 : i32, i32
  }
  func.func @transform_3(%arg0: i32) -> (i32, i32) {
    %c0_i32 = arith.constant 0 : i32
    %c0_i32_0 = arith.constant 0 : i32
    %c0_i32_1 = arith.constant 0 : i32
    return %c0_i32, %c0_i32_0 : i32, i32
  }
}

</mosaic_0001>

<llo_original>
// kernel: _forward_one_arm.1
$region0: #{_forward_one_arm.1}
  #allocation0 [shape = 'u32[]', space=smem, size = 0x4, offset = 0x4, fixed_abs, tag = 'smem constant byte address 0x4 - core index']
  #allocation1 [shape = 'u32[72,128]{1,0:T(1,128)}', space=vmem, size = 0x9000, scoped, tag = 'internal scratch']
  %s0 = inlined_call_operand.vmem [shape: f32[8,2], index: 0, kind: input, shape index: {}]
  %s1 = inlined_call_operand.vmem [shape: f32[2,128], index: 1, kind: input, shape index: {}]
  %s2 = inlined_call_operand.vmem [shape: f32[1,128], index: 2, kind: input, shape index: {}]
  %s3 = inlined_call_operand.hbm [shape: f32[8,128], index: 3, kind: output, shape index: {}]
  %s4 = sld [smem:[#allocation0]]
  $region22: #{_forward_one_arm.1} parent=0
    _
  %s6 = ssub.s32 1, %s4
  %s7 = scalar_select 0, %s6, %s4
  $region1: #{_forward_one_arm.1} parent=0
    #allocation2 [shape = 'u8[4096]{0}', space=vmem, size = 0x1000, scoped, tag = 'output window, operand 0, single buffered']
    #allocation3 [shape = 's32[1]{0}', space=sflag, size = 0x4, scoped, tag = 'scoped memory for _forward_one_arm.1']
    %8 = vsyncpa [#allocation3], 0
    // Predicated region
    $region2: #{_forward_one_arm.1} parent=1 // pred_check
      _
    $region3: #{_forward_one_arm.1} parent=1 // pred_check_branch
      %10 = sbr.rel (0) target = $region5
    $region4: #{_forward_one_arm.1} parent=1 // pred_region
      _
    $region5: #{_forward_one_arm.1} parent=1 // pred_fallthru
      _
    // Predicated region
    $region6: #{_forward_one_arm.1} parent=1 // pred_check
      _
    $region7: #{_forward_one_arm.1} parent=1 // pred_check_branch
      %12 = sbr.rel (0) target = $region9
    $region8: #{_forward_one_arm.1} parent=1 // pred_region
      _
    $region9: #{_forward_one_arm.1} parent=1 // pred_fallthru
      _
    // Predicated region
    $region10: #{_forward_one_arm.1} parent=1 // pred_check
      _
    $region11: #{_forward_one_arm.1} parent=1 // pred_check_branch
      %14 = sbr.rel (0) target = $region13
    $region12: #{_forward_one_arm.1} parent=1 // pred_region
      _
    $region13: #{_forward_one_arm.1} parent=1 // pred_fallthru
      _
    %v15 = vld [vmem:[%s0] sm:$0xff]
    %v16 = vld [vmem:[%s2] sm:$0x1]
    %v18 = vperm.slane %v16, 0
    %v20 = vld [vmem:[%s1] sm:$0x1]
    %22 = vset.pattern.permute.xlu0 0
    %23 = vperm.xlu0 %22, %v15
    %v24 = vpop.permute.xlu0 %23
    %v26 = vperm.slane %v20, 0
    %v27 = vmul.f32 %v24, %v26
    %v28 = vadd.f32 %v18, %v27
    %v29 = vld [vmem:[%s1 + $0x1] sm:$0x1]
    %30 = vset.pattern.permute.xlu0 1
    %31 = vperm.xlu0 %30, %v15
    %v32 = vpop.permute.xlu0 %31
    %v34 = vperm.slane %v29, 0
    %v35 = vmul.f32 %v32, %v34
    %v36 = vadd.f32 %v28, %v35
    %37 = vst [vmem:[#allocation2] sm:$0xff] %v36
    // Predicated region
    $region14: #{_forward_one_arm.1} parent=1 // pred_check
      _
    $region15: #{_forward_one_arm.1} parent=1 // pred_check_branch
      %39 = sbr.rel (0) target = $region17
    $region16: #{_forward_one_arm.1} parent=1 // pred_region
      %41 = vsyncadd [#allocation3], 0
      %s43 = sshll.u32 [#allocation2], 4
      %s44 = int_to_ptr.vmem [resolvable:$true] %s43
      %s45 = sshll.u32 %s3, 4
      %s46 = int_to_ptr.hbm [resolvable:$true] %s45
      %48 = dma.vmem_to_hbm [thread:$0]  %s44, 128, %s46, [#allocation3]
    $region17: #{_forward_one_arm.1} parent=1 // pred_fallthru
      _
    // Predicated region
    $region18: #{_forward_one_arm.1} parent=1 // pred_check
      _
    $region19: #{_forward_one_arm.1} parent=1 // pred_check_branch
      %50 = sbr.rel (0) target = $region21
    $region20: #{_forward_one_arm.1} parent=1 // pred_region
      %52 = dma.done [#allocation3], 128
    $region21: #{_forward_one_arm.1} parent=1 // pred_fallthru
      _
    %53 = vsyncpa [#allocation3], 1

</llo_original>
